<compile_context>
chip_gen: v7x
topology: tpu7x:2x2x1
jax: 0.10.0
libtpu: 0.0.40
codegen_flags: <defaults>
</compile_context>

<pallas_src>
import itertools
import math

import numpy as np
import jax
import jax.numpy as jnp
from jax.experimental import pallas as pl
from jax.experimental.pallas import tpu as pltpu


def make_ntuple(x, ndim=3):
    if isinstance(x, int):
        return (x,) * ndim
    return tuple(x)


def _round_up(x, m):
    return ((x + m - 1) // m) * m


# ----------------------------- Pallas kernel ---------------------------------

def _sparse_conv_kernel(x_ref, w_ref, b_ref, o_ref, acc_ref):
    # grid = (n_point_tiles, kc_tiles); kc (= fused kernel_volume*C_in contraction) is the
    # reduction axis and is last in the grid.  The full weight slab is resident in VMEM
    # (its block index never changes); slice the current contraction chunk dynamically.
    k = pl.program_id(1)
    tile_kc = x_ref.shape[-1]

    @pl.when(k == 0)
    def _():
        acc_ref[...] = jnp.zeros_like(acc_ref)

    start = pl.multiple_of(k * tile_kc, tile_kc)
    w_blk = w_ref[pl.ds(start, tile_kc), :]                      # (tile_kc, c_out_pad)
    acc_ref[...] += jnp.dot(x_ref[...], w_blk,
                            preferred_element_type=jnp.float32)   # MXU, f32 accumulate

    @pl.when(k == pl.num_programs(1) - 1)
    def _():
        o_ref[...] = (acc_ref[...] + b_ref[...]).astype(o_ref.dtype)


def sparse_conv3d_pallas(gathered, weight, bias_pad, *, tile_n, tile_kc):
    """gathered: (N_pad, KC_pad) bf16  -- pre-gathered neighbor features, K-fused, zero-padded.
       weight:   (KC_pad, C_out_pad) bf16.
       bias_pad: (1, C_out_pad) f32 (zeros when the module has no bias).
       Returns   (N_pad, C_out_pad) f32."""
    n_pad, kc_pad = gathered.shape
    c_out_pad = weight.shape[-1]
    assert n_pad % tile_n == 0 and kc_pad % tile_kc == 0
    assert c_out_pad % 128 == 0

    grid = (n_pad // tile_n, kc_pad // tile_kc)
    return pl.pallas_call(
        _sparse_conv_kernel,
        out_shape=jax.ShapeDtypeStruct((n_pad, c_out_pad), jnp.float32),
        grid_spec=pltpu.PrefetchScalarGridSpec(
            num_scalar_prefetch=0,
            grid=grid,
            in_specs=[
                # gathered feature tile: the only large per-step mover.
                pl.BlockSpec((tile_n, tile_kc), lambda i, k: (i, k)),
                # full weight slab, constant block index -> DMA'd once, stays resident in VMEM.
                pl.BlockSpec((kc_pad, c_out_pad), lambda i, k: (0, 0)),
                # bias row, resident.
                pl.BlockSpec((1, c_out_pad), lambda i, k: (0, 0)),
            ],
            out_specs=pl.BlockSpec((tile_n, c_out_pad), lambda i, k: (i, 0)),
            scratch_shapes=[pltpu.VMEM((tile_n, c_out_pad), jnp.float32)],
        ),
        compiler_params=pltpu.CompilerParams(
            dimension_semantics=("parallel", "arbitrary"),
            # blocks here are small; cap comfortably inside v7x's 64 MiB physical VMEM
            # (also fine on v5e/v6e with 128 MiB).
            vmem_limit_bytes=48 * 1024 * 1024,
        ),
    )(gathered, weight, bias_pad)


# ------------------------------ Module wrapper --------------------------------

class Conv3dPallas:
    """JAX/Pallas port of torchsparse Conv3d (submanifold path)."""

    def __init__(self, in_channels, out_channels, kernel_size=3, stride=1,
                 padding=0, dilation=1, bias=False, transposed=False,
                 generative=False, *, key):
        self.in_channels = in_channels
        self.out_channels = out_channels
        self.kernel_size = make_ntuple(kernel_size, 3)
        self.stride = make_ntuple(stride, 3)
        self.dilation = dilation
        _padding = make_ntuple(padding, 3)
        self.padding = ()
        for i in range(3):
            if self.kernel_size[i] % 2 == 1 and self.stride[i] == 1:
                self.padding += ((self.kernel_size[i] - 1) // 2,)
            else:
                self.padding += (_padding[i],)
        self.transposed = transposed
        self.generative = generative
        if self.generative:
            assert self.transposed
        self.kernel_volume = int(np.prod(self.kernel_size))

        # reset_parameters(): uniform(-std, std)
        std = 1.0 / math.sqrt(
            (out_channels if transposed else in_channels) * self.kernel_volume)
        k_key, b_key = jax.random.split(key)
        if self.kernel_volume > 1 or (self.kernel_volume == 1
                                      and self.stride != (1, 1, 1)):
            kshape = (self.kernel_volume, in_channels, out_channels)
        else:
            kshape = (in_channels, out_channels)
        self.kernel = jax.random.uniform(k_key, kshape, jnp.float32,
                                         minval=-std, maxval=std)
        if bias:
            self.bias = jax.random.uniform(b_key, (out_channels,), jnp.float32,
                                           minval=-std, maxval=std)
        else:
            self.bias = None

        # TODO(synk): strided / transposed / generative sparse conv need downsampled
        # output coordinate generation (torchsparse kmap builder); only the
        # submanifold path (stride=1, transposed=False) is implemented here.
        assert self.stride == (1, 1, 1) and not self.transposed

    # ---- coordinate hashing glue (plain numpy): builds the kernel map --------
    def _neighbor_index(self, coords_np):
        kx, ky, kz = self.kernel_size
        offs = list(itertools.product(
            range(-(kx // 2), kx // 2 + 1),
            range(-(ky // 2), ky // 2 + 1),
            range(-(kz // 2), kz // 2 + 1)))
        table = {tuple(c): i for i, c in enumerate(coords_np.tolist())}
        n = coords_np.shape[0]
        nbr = np.full((n, self.kernel_volume), -1, dtype=np.int32)
        for i, c in enumerate(coords_np.tolist()):
            b, x, y, z = c
            for k, (dx, dy, dz) in enumerate(offs):
                key = (b, x + dx * self.dilation, y + dy * self.dilation,
                       z + dz * self.dilation)
                nbr[i, k] = table.get(key, -1)
        return nbr

    # ---- gather + K-fused packing (channels minor, kernel-offset major) ------
    # TODO(synk): for large point clouds, gather inside the kernel via scalar-prefetched
    # neighbor indices / manual DMA (memory_space=pl.ANY) to avoid the K-fold HBM
    # amplification of this pre-materialized tensor.
    def _pack_features(self, feats, coords_np, tile_n, tile_kc):
        n = feats.shape[0]
        c_in = self.in_channels
        K = self.kernel_volume
        nbr = self._neighbor_index(coords_np)                 # (N, K), -1 = missing
        idx = jnp.asarray(np.where(nbr < 0, n, nbr), dtype=jnp.int32)
        feats_pad = jnp.concatenate(
            [feats, jnp.zeros((1, c_in), feats.dtype)], axis=0)   # row n = zeros
        gathered = jnp.take(feats_pad, idx, axis=0)           # (N, K, C_in)
        gathered = gathered.reshape(n, K * c_in)              # K fused into contraction
        kc = K * c_in
        kc_pad = _round_up(kc, tile_kc)
        n_pad = _round_up(n, tile_n)
        gathered = jnp.pad(gathered, ((0, n_pad - n), (0, kc_pad - kc)))
        return gathered.astype(jnp.bfloat16)

    def _pack_weight(self, tile_kc, c_out_pad):
        w = self.kernel
        if w.ndim == 2:                                       # kernel_volume == 1 case
            w = w[None]
        kc = self.kernel_volume * self.in_channels
        w = w.reshape(kc, self.out_channels)
        kc_pad = _round_up(kc, tile_kc)
        w = jnp.pad(w, ((0, kc_pad - kc), (0, c_out_pad - self.out_channels)))
        return w.astype(jnp.bfloat16)

    def _pack_bias(self, c_out_pad):
        if self.bias is None:
            return jnp.zeros((1, c_out_pad), jnp.float32)
        b = jnp.pad(self.bias, (0, c_out_pad - self.out_channels))
        return b.reshape(1, c_out_pad).astype(jnp.float32)

    def __call__(self, feats, coords_np, *, tile_n=256, tile_kc=512):
        n = feats.shape[0]
        kc = self.kernel_volume * self.in_channels
        # Shape tiles toward the MXU: 128-multiple point tiles, >=256-deep contraction chunks
        # where possible, lane-dense (128-multiple) output columns.
        tile_kc = min(tile_kc, _round_up(kc, 128))
        tile_n = min(tile_n, _round_up(n, 128))
        c_out_pad = _round_up(self.out_channels, 128)

        gathered = self._pack_features(feats, coords_np, tile_n, tile_kc)
        weight = self._pack_weight(tile_kc, c_out_pad)
        bias_pad = self._pack_bias(c_out_pad)

        out = sparse_conv3d_pallas(gathered, weight, bias_pad,
                                   tile_n=tile_n, tile_kc=tile_kc)
        out = out[:n, :self.out_channels].astype(feats.dtype)
        return out, gathered, weight, bias_pad


# ----------------------------------- main --------------------------------------

if __name__ == "__main__":
    key = jax.random.PRNGKey(0)
    k_coords_b, k_coords_xyz, k_feats, k_params = jax.random.split(key, 4)

    # Small synthetic sparse tensor: batch=2, spatial grid 8^3, ~64 points.
    n_raw, c_in, c_out, spatial, batch = 64, 16, 32, 8, 2
    b = jax.random.randint(k_coords_b, (n_raw, 1), 0, batch)
    xyz = jax.random.randint(k_coords_xyz, (n_raw, 3), 0, spatial)
    coords_np = np.unique(np.asarray(jnp.concatenate([b, xyz], axis=1)), axis=0)
    n = coords_np.shape[0]
    feats = jax.random.normal(k_feats, (n, c_in), jnp.float32)

    conv = Conv3dPallas(c_in, c_out, kernel_size=3, stride=1, bias=False,
                        key=k_params)

    out, gathered, weight, bias_pad = conv(feats, coords_np)
    out = jax.block_until_ready(out)

    # Reference (same bf16-quantized operands, plain JAX f32 matmul) to confirm kernel math.
    ref = (jnp.dot(gathered.astype(jnp.float32),
                   weight.astype(jnp.float32)) + bias_pad)[:n, :c_out]
    assert out.shape == (n, c_out)
    np.testing.assert_allclose(np.asarray(out), np.asarray(ref),
                               rtol=1e-3, atol=1e-3)

    print("KERNEL_OK")
</pallas_src>

<mosaic_0001>
module attributes {stable_mosaic.version = 11 : i64} {
  func.func @_sparse_conv_kernel(%arg0: i32, %arg1: i32, %arg2: memref<128x512xbf16, #tpu.memory_space<vmem>>, %arg3: memref<512x128xbf16, #tpu.memory_space<vmem>>, %arg4: memref<1x128xf32, #tpu.memory_space<vmem>>, %arg5: memref<128x128xf32, #tpu.memory_space<vmem>>, %arg6: memref<128x128xf32, #tpu.memory_space<vmem>>) attributes {dimension_semantics = [#tpu.dimension_semantics<parallel>, #tpu.dimension_semantics<arbitrary>], iteration_bounds = array<i64: 1, 1>, scalar_prefetch = 0 : i64, scratch_operands = 1 : i64, tpu.core_type = #tpu.core_type<tc>, window_params = [{transform_indices = @transform_0, window_bounds = array<i64: 128, 512>}, {pipeline_mode = #tpu.pipeline_mode<synchronous>, transform_indices = @transform_1, window_bounds = array<i64: 512, 128>}, {pipeline_mode = #tpu.pipeline_mode<synchronous>, transform_indices = @transform_2, window_bounds = array<i64: 1, 128>}, {transform_indices = @transform_3, window_bounds = array<i64: 128, 128>}]} {
    %c0_i32 = arith.constant 0 : i32
    %0 = arith.cmpi eq, %arg1, %c0_i32 : i32
    %1 = arith.extui %0 : i1 to i32
    %c0_i32_0 = arith.constant 0 : i32
    %2 = arith.cmpi ne, %1, %c0_i32_0 : i32
    scf.if %2 {
      %cst_9 = arith.constant 0.000000e+00 : f32
      %15 = vector.broadcast %cst_9 : f32 to vector<128x128xf32>
      %c0_10 = arith.constant 0 : index
      %c0_11 = arith.constant 0 : index
      %16 = vector.load %arg6[%c0_10, %c0_11] : memref<128x128xf32, #tpu.memory_space<vmem>>, vector<128x128xf32>
      tpu.vector_store %arg6[%c0_10, %c0_11], %15 {strides = array<i32>} : memref<128x128xf32, #tpu.memory_space<vmem>>, vector<128x128xf32>,
    } else {
    }
    %c512_i32 = arith.constant 512 : i32
    %3 = arith.muli %arg1, %c512_i32 : i32
    %4 = tpu.assume_multiple %3, 512 : i32
    %5 = arith.index_cast %4 : i32 to index
    %c0 = arith.constant 0 : index
    %6 = vector.load %arg3[%5, %c0] : memref<512x128xbf16, #tpu.memory_space<vmem>>, vector<512x128xbf16>
    %c0_1 = arith.constant 0 : index
    %c0_2 = arith.constant 0 : index
    %7 = vector.load %arg6[%c0_1, %c0_2] : memref<128x128xf32, #tpu.memory_space<vmem>>, vector<128x128xf32>
    %c0_3 = arith.constant 0 : index
    %c0_4 = arith.constant 0 : index
    %8 = vector.load %arg2[%c0_3, %c0_4] : memref<128x512xbf16, #tpu.memory_space<vmem>>, vector<128x512xbf16>
    %cst = arith.constant dense<0.000000e+00> : vector<128x128xf32>
    %9 = tpu.matmul %8, %6, %cst {dimension_numbers = #tpu.dot_dimension_numbers<[1], [0], [0], [1], [0, 0, 1, 1], [], []>} : vector<128x512xbf16>, vector<512x128xbf16>, vector<128x128xf32> -> vector<128x128xf32>
    %10 = arith.addf %7, %9 : vector<128x128xf32>
    %c0_5 = arith.constant 0 : index
    %c0_6 = arith.constant 0 : index
    %11 = vector.load %arg6[%c0_5, %c0_6] : memref<128x128xf32, #tpu.memory_space<vmem>>, vector<128x128xf32>
    tpu.vector_store %arg6[%c0_5, %c0_6], %10 {strides = array<i32>} : memref<128x128xf32, #tpu.memory_space<vmem>>, vector<128x128xf32>,
    %c0_i32_7 = arith.constant 0 : i32
    %12 = arith.cmpi eq, %arg1, %c0_i32_7 : i32
    %13 = arith.extui %12 : i1 to i32
    %c0_i32_8 = arith.constant 0 : i32
    %14 = arith.cmpi ne, %13, %c0_i32_8 : i32
    scf.if %14 {
      %c0_9 = arith.constant 0 : index
      %c0_10 = arith.constant 0 : index
      %15 = vector.load %arg6[%c0_9, %c0_10] : memref<128x128xf32, #tpu.memory_space<vmem>>, vector<128x128xf32>
      %c0_11 = arith.constant 0 : index
      %c0_12 = arith.constant 0 : index
      %16 = vector.load %arg4[%c0_11, %c0_12] : memref<1x128xf32, #tpu.memory_space<vmem>>, vector<1x128xf32>
      %17 = vector.broadcast %16 : vector<1x128xf32> to vector<128x128xf32>
      %18 = arith.addf %15, %17 : vector<128x128xf32>
      %c0_13 = arith.constant 0 : index
      %c0_14 = arith.constant 0 : index
      %19 = vector.load %arg5[%c0_13, %c0_14] : memref<128x128xf32, #tpu.memory_space<vmem>>, vector<128x128xf32>
      tpu.vector_store %arg5[%c0_13, %c0_14], %18 {strides = array<i32>} : memref<128x128xf32, #tpu.memory_space<vmem>>, vector<128x128xf32>,
    } else {
    }
    return
  }
  func.func @transform_0(%arg0: i32, %arg1: i32) -> (i32, i32) {
    %c0_i32 = arith.constant 0 : i32
    return %arg0, %arg1 : i32, i32
  }
  func.func @transform_1(%arg0: i32, %arg1: i32) -> (i32, i32) {
    %c0_i32 = arith.constant 0 : i32
    %c0_i32_0 = arith.constant 0 : i32
    %c0_i32_1 = arith.constant 0 : i32
    return %c0_i32, %c0_i32_0 : i32, i32
  }
  func.func @transform_2(%arg0: i32, %arg1: i32) -> (i32, i32) {
    %c0_i32 = arith.constant 0 : i32
    %c0_i32_0 = arith.constant 0 : i32
    %c0_i32_1 = arith.constant 0 : i32
    return %c0_i32, %c0_i32_0 : i32, i32
  }
  func.func @transform_3(%arg0: i32, %arg1: i32) -> (i32, i32) {
    %c0_i32 = arith.constant 0 : i32
    %c0_i32_0 = arith.constant 0 : i32
    return %arg0, %c0_i32 : i32, i32
  }
}

</mosaic_0001>

<llo_original>
// kernel: tpu_custom_call.1
$region0: #{tpu_custom_call.1}
  #allocation0 [shape = 'u32[]', space=smem, size = 0x4, offset = 0x4, fixed_abs, tag = 'smem constant byte address 0x4 - core index']
  #allocation1 [shape = 'u32[144,128]{1,0:T(1,128)}', space=vmem, size = 0x12000, scoped, tag = 'internal scratch']
  #allocation2 [shape = 'f32[128,128]{1,0:T(8,128)}', space=vmem, size = 0x10000, scoped, tag = 'scratch operand']
  %s0 = inlined_call_operand.hbm [shape: bf16[128,512], index: 0, kind: input, shape index: {}]
  %s1 = inlined_call_operand.hbm [shape: bf16[512,128], index: 1, kind: input, shape index: {}]
  %s2 = inlined_call_operand.vmem [shape: f32[1,128], index: 2, kind: input, shape index: {}]
  %s3 = inlined_call_operand.hbm [shape: f32[128,128], index: 3, kind: output, shape index: {}]
  %s4 = sld [smem:[#allocation0]]
  $region38: #{tpu_custom_call.1} parent=0
    _
  %s6 = ssub.s32 1, %s4
  %s7 = scalar_select 0, %s6, %s4
  $region1: #{tpu_custom_call.1} parent=0
    #allocation3 [shape = 'u8[131072]{0}', space=vmem, size = 0x20000, scoped, tag = 'input window, operand 0, single buffered']
    #allocation4 [shape = 's32[1]{0}', space=sflag, size = 0x4, scoped, tag = 'scoped memory for tpu_custom_call.1']
    #allocation5 [shape = 's32[1]{0}', space=sflag, size = 0x4, scoped, tag = 'scoped memory for tpu_custom_call.1']
    #allocation6 [shape = 'u8[131072]{0}', space=vmem, size = 0x20000, scoped, tag = 'input window, operand 1, single buffered']
    #allocation7 [shape = 's32[1]{0}', space=sflag, size = 0x4, scoped, tag = 'scoped memory for tpu_custom_call.1']
    #allocation8 [shape = 'u8[65536]{0}', space=vmem, size = 0x10000, scoped, tag = 'output window, operand 0, single buffered']
    %8 = vsyncpa [#allocation4], 0
    %9 = vsyncpa [#allocation7], 0
    %10 = vsyncpa [#allocation5], 0
    // Predicated region
    $region2: #{tpu_custom_call.1} parent=1 // pred_check
      _
    $region3: #{tpu_custom_call.1} parent=1 // pred_check_branch
      %12 = sbr.rel (0) target = $region5
    $region4: #{tpu_custom_call.1} parent=1 // pred_region
      %s14 = ssub.s32 4096, 4096
      %15 = vsyncadd [#allocation4], %s14
      %s16 = sshll.u32 [#allocation3], 4
      %s17 = int_to_ptr.vmem [resolvable:$true] %s16
      %22 = dma.hbm_to_vmem [thread:$0]  %s0, 4096, %s17, [#allocation4], 256, 256, 16
    $region5: #{tpu_custom_call.1} parent=1 // pred_fallthru
      _
    // Predicated region
    $region6: #{tpu_custom_call.1} parent=1 // pred_check
      _
    $region7: #{tpu_custom_call.1} parent=1 // pred_check_branch
      %24 = sbr.rel (0) target = $region9
    $region8: #{tpu_custom_call.1} parent=1 // pred_region
      %s26 = ssub.s32 4096, 4096
      %27 = vsyncadd [#allocation7], %s26
      %s28 = sshll.u32 [#allocation6], 4
      %s29 = int_to_ptr.vmem [resolvable:$true] %s28
      %34 = dma.hbm_to_vmem [thread:$0]  %s1, 4096, %s29, [#allocation7], 64, 64, 4
    $region9: #{tpu_custom_call.1} parent=1 // pred_fallthru
      _
    // Predicated region
    $region10: #{tpu_custom_call.1} parent=1 // pred_check
      _
    $region11: #{tpu_custom_call.1} parent=1 // pred_check_branch
      %36 = sbr.rel (0) target = $region13
    $region12: #{tpu_custom_call.1} parent=1 // pred_region
      _
    $region13: #{tpu_custom_call.1} parent=1 // pred_fallthru
      _
    // Predicated region
    $region14: #{tpu_custom_call.1} parent=1 // pred_check
      _
    $region15: #{tpu_custom_call.1} parent=1 // pred_check_branch
      %38 = sbr.rel (0) target = $region17
    $region16: #{tpu_custom_call.1} parent=1 // pred_region
      %39 = dma.done [#allocation4], 4096
    $region17: #{tpu_custom_call.1} parent=1 // pred_fallthru
      _
    // Predicated region
    $region18: #{tpu_custom_call.1} parent=1 // pred_check
      _
    $region19: #{tpu_custom_call.1} parent=1 // pred_check_branch
      %41 = sbr.rel (0) target = $region21
    $region20: #{tpu_custom_call.1} parent=1 // pred_region
      %42 = dma.done [#allocation7], 4096
    $region21: #{tpu_custom_call.1} parent=1 // pred_fallthru
      _
    %p44 = scmp.eq.s32.totalorder 0, 0
    // Predicated region
    $region22: #{tpu_custom_call.1} parent=1 // pred_check
      %p45 = pneg %p44
    $region23: #{tpu_custom_call.1} parent=1 // pred_check_branch
      %47 = sbr.rel (%p45) target = $region25
    $region24: #{tpu_custom_call.1} parent=1 // pred_region
      %48 = vst [vmem:[#allocation2] sm:$0xff] 0.0
      %49 = vst [vmem:[#allocation2 + $0x8] sm:$0xff] 0.0
      %50 = vst [vmem:[#allocation2 + $0x10] sm:$0xff] 0.0
      %51 = vst [vmem:[#allocation2 + $0x18] sm:$0xff] 0.0
      %52 = vst [vmem:[#allocation2 + $0x20] sm:$0xff] 0.0
      %53 = vst [vmem:[#allocation2 + $0x28] sm:$0xff] 0.0
      %54 = vst [vmem:[#allocation2 + $0x30] sm:$0xff] 0.0
      %55 = vst [vmem:[#allocation2 + $0x38] sm:$0xff] 0.0
      %56 = vst [vmem:[#allocation2 + $0x40] sm:$0xff] 0.0
      %57 = vst [vmem:[#allocation2 + $0x48] sm:$0xff] 0.0
      %58 = vst [vmem:[#allocation2 + $0x50] sm:$0xff] 0.0
      %59 = vst [vmem:[#allocation2 + $0x58] sm:$0xff] 0.0
      %60 = vst [vmem:[#allocation2 + $0x60] sm:$0xff] 0.0
      %61 = vst [vmem:[#allocation2 + $0x68] sm:$0xff] 0.0
      %62 = vst [vmem:[#allocation2 + $0x70] sm:$0xff] 0.0
      %63 = vst [vmem:[#allocation2 + $0x78] sm:$0xff] 0.0
    $region25: #{tpu_custom_call.1} parent=1 // pred_fallthru
      _
    %s64 = smul.u32 0, 512
    %s65 = sshra.s32 %s64, 3
    %s66 = sand.u32 %s64, 7
    %s67 = smul.addr %s65, 4
    %s68 = scalar_lea.vmem [#allocation6], %s67
    %v69 = vld [vmem:[%s68] sm:$0xf]
    %v70 = vld [vmem:[%s68 + $0x4] sm:$0xf]
    %v71 = vld [vmem:[%s68 + $0x8] sm:$0xf]
    %v72 = vld [vmem:[%s68 + $0xc] sm:$0xf]
    %v73 = vld [vmem:[%s68 + $0x10] sm:$0xf]
    %v74 = vld [vmem:[%s68 + $0x14] sm:$0xf]
    %v75 = vld [vmem:[%s68 + $0x18] sm:$0xf]
    %v76 = vld [vmem:[%s68 + $0x1c] sm:$0xf]
    %v77 = vld [vmem:[%s68 + $0x20] sm:$0xf]
    %v78 = vld [vmem:[%s68 + $0x24] sm:$0xf]
    %v79 = vld [vmem:[%s68 + $0x28] sm:$0xf]
    %v80 = vld [vmem:[%s68 + $0x2c] sm:$0xf]
    %v81 = vld [vmem:[%s68 + $0x30] sm:$0xf]
    %v82 = vld [vmem:[%s68 + $0x34] sm:$0xf]
    %v83 = vld [vmem:[%s68 + $0x38] sm:$0xf]
    %v84 = vld [vmem:[%s68 + $0x3c] sm:$0xf]
    %v85 = vld [vmem:[%s68 + $0x40] sm:$0xf]
    %v86 = vld [vmem:[%s68 + $0x44] sm:$0xf]
    %v87 = vld [vmem:[%s68 + $0x48] sm:$0xf]
    %v88 = vld [vmem:[%s68 + $0x4c] sm:$0xf]
    %v89 = vld [vmem:[%s68 + $0x50] sm:$0xf]
    %v90 = vld [vmem:[%s68 + $0x54] sm:$0xf]
    %v91 = vld [vmem:[%s68 + $0x58] sm:$0xf]
    %v92 = vld [vmem:[%s68 + $0x5c] sm:$0xf]
    %v93 = vld [vmem:[%s68 + $0x60] sm:$0xf]
    %v94 = vld [vmem:[%s68 + $0x64] sm:$0xf]
    %v95 = vld [vmem:[%s68 + $0x68] sm:$0xf]
    %v96 = vld [vmem:[%s68 + $0x6c] sm:$0xf]
    %v97 = vld [vmem:[%s68 + $0x70] sm:$0xf]
    %v98 = vld [vmem:[%s68 + $0x74] sm:$0xf]
    %v99 = vld [vmem:[%s68 + $0x78] sm:$0xf]
    %v100 = vld [vmem:[%s68 + $0x7c] sm:$0xf]
    %v101 = vld [vmem:[%s68 + $0x80] sm:$0xf]
    %v102 = vld [vmem:[%s68 + $0x84] sm:$0xf]
    %v103 = vld [vmem:[%s68 + $0x88] sm:$0xf]
    %v104 = vld [vmem:[%s68 + $0x8c] sm:$0xf]
    %v105 = vld [vmem:[%s68 + $0x90] sm:$0xf]
    %v106 = vld [vmem:[%s68 + $0x94] sm:$0xf]
    %v107 = vld [vmem:[%s68 + $0x98] sm:$0xf]
    %v108 = vld [vmem:[%s68 + $0x9c] sm:$0xf]
    %v109 = vld [vmem:[%s68 + $0xa0] sm:$0xf]
    %v110 = vld [vmem:[%s68 + $0xa4] sm:$0xf]
    %v111 = vld [vmem:[%s68 + $0xa8] sm:$0xf]
    %v112 = vld [vmem:[%s68 + $0xac] sm:$0xf]
    %v113 = vld [vmem:[%s68 + $0xb0] sm:$0xf]
    %v114 = vld [vmem:[%s68 + $0xb4] sm:$0xf]
    %v115 = vld [vmem:[%s68 + $0xb8] sm:$0xf]
    %v116 = vld [vmem:[%s68 + $0xbc] sm:$0xf]
    %v117 = vld [vmem:[%s68 + $0xc0] sm:$0xf]
    %v118 = vld [vmem:[%s68 + $0xc4] sm:$0xf]
    %v119 = vld [vmem:[%s68 + $0xc8] sm:$0xf]
    %v120 = vld [vmem:[%s68 + $0xcc] sm:$0xf]
    %v121 = vld [vmem:[%s68 + $0xd0] sm:$0xf]
    %v122 = vld [vmem:[%s68 + $0xd4] sm:$0xf]
    %v123 = vld [vmem:[%s68 + $0xd8] sm:$0xf]
    %v124 = vld [vmem:[%s68 + $0xdc] sm:$0xf]
    %v125 = vld [vmem:[%s68 + $0xe0] sm:$0xf]
    %v126 = vld [vmem:[%s68 + $0xe4] sm:$0xf]
    %v127 = vld [vmem:[%s68 + $0xe8] sm:$0xf]
    %v128 = vld [vmem:[%s68 + $0xec] sm:$0xf]
    %v129 = vld [vmem:[%s68 + $0xf0] sm:$0xf]
    %v130 = vld [vmem:[%s68 + $0xf4] sm:$0xf]
    %v131 = vld [vmem:[%s68 + $0xf8] sm:$0xf]
    %v132 = vld [vmem:[%s68 + $0xfc] sm:$0xf]
    %v133 = vld [vmem:[#allocation2] sm:$0xff]
    %v134 = vld [vmem:[#allocation2 + $0x8] sm:$0xff]
    %v135 = vld [vmem:[#allocation2 + $0x10] sm:$0xff]
    %v136 = vld [vmem:[#allocation2 + $0x18] sm:$0xff]
    %v137 = vld [vmem:[#allocation2 + $0x20] sm:$0xff]
    %v138 = vld [vmem:[#allocation2 + $0x28] sm:$0xff]
    %v139 = vld [vmem:[#allocation2 + $0x30] sm:$0xff]
    %v140 = vld [vmem:[#allocation2 + $0x38] sm:$0xff]
    %v141 = vld [vmem:[#allocation2 + $0x40] sm:$0xff]
    %v142 = vld [vmem:[#allocation2 + $0x48] sm:$0xff]
    %v143 = vld [vmem:[#allocation2 + $0x50] sm:$0xff]
    %v144 = vld [vmem:[#allocation2 + $0x58] sm:$0xff]
    %v145 = vld [vmem:[#allocation2 + $0x60] sm:$0xff]
    %v146 = vld [vmem:[#allocation2 + $0x68] sm:$0xff]
    %v147 = vld [vmem:[#allocation2 + $0x70] sm:$0xff]
    %v148 = vld [vmem:[#allocation2 + $0x78] sm:$0xff]
    %v149 = vld [vmem:[#allocation3] sm:$0xff]
    %v150 = vld [vmem:[#allocation3 + $0x8] sm:$0xff]
    %v151 = vld [vmem:[#allocation3 + $0x10] sm:$0xff]
    %v152 = vld [vmem:[#allocation3 + $0x18] sm:$0xff]
    %v153 = vld [vmem:[#allocation3 + $0x20] sm:$0xff]
    %v154 = vld [vmem:[#allocation3 + $0x28] sm:$0xff]
    %v155 = vld [vmem:[#allocation3 + $0x30] sm:$0xff]
    %v156 = vld [vmem:[#allocation3 + $0x38] sm:$0xff]
    %v157 = vld [vmem:[#allocation3 + $0x40] sm:$0xff]
    %v158 = vld [vmem:[#allocation3 + $0x48] sm:$0xff]
    %v159 = vld [vmem:[#allocation3 + $0x50] sm:$0xff]
    %v160 = vld [vmem:[#allocation3 + $0x58] sm:$0xff]
    %v161 = vld [vmem:[#allocation3 + $0x60] sm:$0xff]
    %v162 = vld [vmem:[#allocation3 + $0x68] sm:$0xff]
    %v163 = vld [vmem:[#allocation3 + $0x70] sm:$0xff]
    %v164 = vld [vmem:[#allocation3 + $0x78] sm:$0xff]
    %v165 = vld [vmem:[#allocation3 + $0x80] sm:$0xff]
    %v166 = vld [vmem:[#allocation3 + $0x88] sm:$0xff]
    %v167 = vld [vmem:[#allocation3 + $0x90] sm:$0xff]
    %v168 = vld [vmem:[#allocation3 + $0x98] sm:$0xff]
    %v169 = vld [vmem:[#allocation3 + $0xa0] sm:$0xff]
    %v170 = vld [vmem:[#allocation3 + $0xa8] sm:$0xff]
    %v171 = vld [vmem:[#allocation3 + $0xb0] sm:$0xff]
    %v172 = vld [vmem:[#allocation3 + $0xb8] sm:$0xff]
    %v173 = vld [vmem:[#allocation3 + $0xc0] sm:$0xff]
    %v174 = vld [vmem:[#allocation3 + $0xc8] sm:$0xff]
    %v175 = vld [vmem:[#allocation3 + $0xd0] sm:$0xff]
    %v176 = vld [vmem:[#allocation3 + $0xd8] sm:$0xff]
    %v177 = vld [vmem:[#allocation3 + $0xe0] sm:$0xff]
    %v178 = vld [vmem:[#allocation3 + $0xe8] sm:$0xff]
    %v179 = vld [vmem:[#allocation3 + $0xf0] sm:$0xff]
    %v180 = vld [vmem:[#allocation3 + $0xf8] sm:$0xff]
    %v213 = vunpack.c.l.b16 %v149
    %v214 = vunpack.c.h.b16 %v149
    %v215 = vunpack.c.l.b16 %v150
    %v216 = vunpack.c.h.b16 %v150
    %v217 = vunpack.c.l.b16 %v151
    %v218 = vunpack.c.h.b16 %v151
    %v219 = vunpack.c.l.b16 %v152
    %v220 = vunpack.c.h.b16 %v152
    %v221 = vunpack.c.l.b16 %v153
    %v222 = vunpack.c.h.b16 %v153
    %v223 = vunpack.c.l.b16 %v154
    %v224 = vunpack.c.h.b16 %v154
    %v225 = vunpack.c.l.b16 %v155
    %v226 = vunpack.c.h.b16 %v155
    %v227 = vunpack.c.l.b16 %v156
    %v228 = vunpack.c.h.b16 %v156
    %v229 = vunpack.c.l.b16 %v157
    %v230 = vunpack.c.h.b16 %v157
    %v231 = vunpack.c.l.b16 %v158
    %v232 = vunpack.c.h.b16 %v158
    %v233 = vunpack.c.l.b16 %v159
    %v234 = vunpack.c.h.b16 %v159
    %v235 = vunpack.c.l.b16 %v160
    %v236 = vunpack.c.h.b16 %v160
    %v237 = vunpack.c.l.b16 %v161
    %v238 = vunpack.c.h.b16 %v161
    %v239 = vunpack.c.l.b16 %v162
    %v240 = vunpack.c.h.b16 %v162
    %v241 = vunpack.c.l.b16 %v163
    %v242 = vunpack.c.h.b16 %v163
    %v243 = vunpack.c.l.b16 %v164
    %v244 = vunpack.c.h.b16 %v164
    %v245 = vunpack.c.l.b16 %v165
    %v246 = vunpack.c.h.b16 %v165
    %v247 = vunpack.c.l.b16 %v166
    %v248 = vunpack.c.h.b16 %v166
    %v249 = vunpack.c.l.b16 %v167
    %v250 = vunpack.c.h.b16 %v167
    %v251 = vunpack.c.l.b16 %v168
    %v252 = vunpack.c.h.b16 %v168
    %v253 = vunpack.c.l.b16 %v169
    %v254 = vunpack.c.h.b16 %v169
    %v255 = vunpack.c.l.b16 %v170
    %v256 = vunpack.c.h.b16 %v170
    %v257 = vunpack.c.l.b16 %v171
    %v258 = vunpack.c.h.b16 %v171
    %v259 = vunpack.c.l.b16 %v172
    %v260 = vunpack.c.h.b16 %v172
    %v261 = vunpack.c.l.b16 %v173
    %v262 = vunpack.c.h.b16 %v173
    %v263 = vunpack.c.l.b16 %v174
    %v264 = vunpack.c.h.b16 %v174
    %v265 = vunpack.c.l.b16 %v175
    %v266 = vunpack.c.h.b16 %v175
    %v267 = vunpack.c.l.b16 %v176
    %v268 = vunpack.c.h.b16 %v176
    %v269 = vunpack.c.l.b16 %v177
    %v270 = vunpack.c.h.b16 %v177
    %v271 = vunpack.c.l.b16 %v178
    %v272 = vunpack.c.h.b16 %v178
    %v273 = vunpack.c.l.b16 %v179
    %v274 = vunpack.c.h.b16 %v179
    %v275 = vunpack.c.l.b16 %v180
    %v276 = vunpack.c.h.b16 %v180
    %v277 = vpack.c.b16 %v217, %v213
    %v278 = vpack.c.b16 %v218, %v214
    %v279 = vpack.c.b16 %v219, %v215
    %v280 = vpack.c.b16 %v220, %v216
    %v281 = vpack.c.b16 %v225, %v221
    %v282 = vpack.c.b16 %v226, %v222
    %v283 = vpack.c.b16 %v227, %v223
    %v284 = vpack.c.b16 %v228, %v224
    %v285 = vpack.c.b16 %v233, %v229
    %v286 = vpack.c.b16 %v234, %v230
    %v287 = vpack.c.b16 %v235, %v231
    %v288 = vpack.c.b16 %v236, %v232
    %v289 = vpack.c.b16 %v241, %v237
    %v290 = vpack.c.b16 %v242, %v238
    %v291 = vpack.c.b16 %v243, %v239
    %v292 = vpack.c.b16 %v244, %v240
    %v293 = vpack.c.b16 %v249, %v245
    %v294 = vpack.c.b16 %v250, %v246
    %v295 = vpack.c.b16 %v251, %v247
    %v296 = vpack.c.b16 %v252, %v248
    %v297 = vpack.c.b16 %v257, %v253
    %v298 = vpack.c.b16 %v258, %v254
    %v299 = vpack.c.b16 %v259, %v255
    %v300 = vpack.c.b16 %v260, %v256
    %v301 = vpack.c.b16 %v265, %v261
    %v302 = vpack.c.b16 %v266, %v262
    %v303 = vpack.c.b16 %v267, %v263
    %v304 = vpack.c.b16 %v268, %v264
    %v305 = vpack.c.b16 %v273, %v269
    %v306 = vpack.c.b16 %v274, %v270
    %v307 = vpack.c.b16 %v275, %v271
    %v308 = vpack.c.b16 %v276, %v272
    %v405 = vunpack.c.l.b16 %v69
    %v406 = vunpack.c.l.b16 %v70
    %v407 = vunpack.c.l.b16 %v71
    %v408 = vunpack.c.l.b16 %v72
    %v409 = vunpack.c.l.b16 %v73
    %v410 = vunpack.c.l.b16 %v74
    %v411 = vunpack.c.l.b16 %v75
    %v412 = vunpack.c.l.b16 %v76
    %v413 = vunpack.c.l.b16 %v77
    %v414 = vunpack.c.l.b16 %v78
    %v415 = vunpack.c.l.b16 %v79
    %v416 = vunpack.c.l.b16 %v80
    %v417 = vunpack.c.l.b16 %v81
    %v418 = vunpack.c.l.b16 %v82
    %v419 = vunpack.c.l.b16 %v83
    %v420 = vunpack.c.l.b16 %v84
    %v421 = vunpack.c.l.b16 %v85
    %v422 = vunpack.c.l.b16 %v86
    %v423 = vunpack.c.l.b16 %v87
    %v424 = vunpack.c.l.b16 %v88
    %v425 = vunpack.c.l.b16 %v89
    %v426 = vunpack.c.l.b16 %v90
    %v427 = vunpack.c.l.b16 %v91
    %v428 = vunpack.c.l.b16 %v92
    %v429 = vunpack.c.l.b16 %v93
    %v430 = vunpack.c.l.b16 %v94
    %v431 = vunpack.c.l.b16 %v95
    %v432 = vunpack.c.l.b16 %v96
    %v433 = vunpack.c.l.b16 %v97
    %v434 = vunpack.c.l.b16 %v98
    %v435 = vunpack.c.l.b16 %v99
    %v436 = vunpack.c.l.b16 %v100
    %v437 = vunpack.c.l.b16 %v101
    %v438 = vunpack.c.l.b16 %v102
    %v439 = vunpack.c.l.b16 %v103
    %v440 = vunpack.c.l.b16 %v104
    %v441 = vunpack.c.l.b16 %v105
    %v442 = vunpack.c.l.b16 %v106
    %v443 = vunpack.c.l.b16 %v107
    %v444 = vunpack.c.l.b16 %v108
    %v445 = vunpack.c.l.b16 %v109
    %v446 = vunpack.c.l.b16 %v110
    %v447 = vunpack.c.l.b16 %v111
    %v448 = vunpack.c.l.b16 %v112
    %v449 = vunpack.c.l.b16 %v113
    %v450 = vunpack.c.l.b16 %v114
    %v451 = vunpack.c.l.b16 %v115
    %v452 = vunpack.c.l.b16 %v116
    %v453 = vunpack.c.l.b16 %v117
    %v454 = vunpack.c.l.b16 %v118
    %v455 = vunpack.c.l.b16 %v119
    %v456 = vunpack.c.l.b16 %v120
    %v457 = vunpack.c.l.b16 %v121
    %v458 = vunpack.c.l.b16 %v122
    %v459 = vunpack.c.l.b16 %v123
    %v460 = vunpack.c.l.b16 %v124
    %v461 = vunpack.c.l.b16 %v125
    %v462 = vunpack.c.l.b16 %v126
    %v463 = vunpack.c.l.b16 %v127
    %v464 = vunpack.c.l.b16 %v128
    %v465 = vunpack.c.l.b16 %v129
    %v466 = vunpack.c.l.b16 %v130
    %v467 = vunpack.c.l.b16 %v131
    %v468 = vunpack.c.l.b16 %v132
    %v469 = vpack.c.b16 %v406, %v405
    %v470 = vpack.c.b16 %v408, %v407
    %v471 = vpack.c.b16 %v410, %v409
    %v472 = vpack.c.b16 %v412, %v411
    %v473 = vpack.c.b16 %v414, %v413
    %v474 = vpack.c.b16 %v416, %v415
    %v475 = vpack.c.b16 %v418, %v417
    %v476 = vpack.c.b16 %v420, %v419
    %v477 = vpack.c.b16 %v422, %v421
    %v478 = vpack.c.b16 %v424, %v423
    %v479 = vpack.c.b16 %v426, %v425
    %v480 = vpack.c.b16 %v428, %v427
    %v481 = vpack.c.b16 %v430, %v429
    %v482 = vpack.c.b16 %v432, %v431
    %v483 = vpack.c.b16 %v434, %v433
    %v484 = vpack.c.b16 %v436, %v435
    %v485 = vpack.c.b16 %v438, %v437
    %v486 = vpack.c.b16 %v440, %v439
    %v487 = vpack.c.b16 %v442, %v441
    %v488 = vpack.c.b16 %v444, %v443
    %v489 = vpack.c.b16 %v446, %v445
    %v490 = vpack.c.b16 %v448, %v447
    %v491 = vpack.c.b16 %v450, %v449
    %v492 = vpack.c.b16 %v452, %v451
    %v493 = vpack.c.b16 %v454, %v453
    %v494 = vpack.c.b16 %v456, %v455
    %v495 = vpack.c.b16 %v458, %v457
    %v496 = vpack.c.b16 %v460, %v459
    %v497 = vpack.c.b16 %v462, %v461
    %v498 = vpack.c.b16 %v464, %v463
    %v499 = vpack.c.b16 %v466, %v465
    %v500 = vpack.c.b16 %v468, %v467
    %533 = vmatprep.subr.bf16.mxu0 0
    %534 = vmatpush1.bf16.msra.mxu0 %v469
    %535 = vmatprep.subr.bf16.mxu0 0
    %536 = vmatpush1.bf16.msra.mxu0 %v470
    %537 = vmatprep.subr.bf16.mxu0 0
    %538 = vmatpush1.bf16.msra.mxu0 %v471
    %539 = vmatprep.subr.bf16.mxu0 0
    %540 = vmatpush1.bf16.msra.mxu0 %v472
    %541 = vmatprep.subr.bf16.mxu0 0
    %542 = vmatpush1.bf16.msra.mxu0 %v473
    %543 = vmatprep.subr.bf16.mxu0 0
    %544 = vmatpush1.bf16.msra.mxu0 %v474
    %545 = vmatprep.subr.bf16.mxu0 0
    %546 = vmatpush1.bf16.msra.mxu0 %v475
    %547 = vmatprep.subr.bf16.mxu0 0
    %548 = vmatpush1.bf16.msra.mxu0 %v476
    %549 = vmatprep.subr.bf16.mxu0 0
    %550 = vmatpush1.bf16.msra.mxu0 %v477
    %551 = vmatprep.subr.bf16.mxu0 0
    %552 = vmatpush1.bf16.msra.mxu0 %v478
    %553 = vmatprep.subr.bf16.mxu0 0
    %554 = vmatpush1.bf16.msra.mxu0 %v479
    %555 = vmatprep.subr.bf16.mxu0 0
    %556 = vmatpush1.bf16.msra.mxu0 %v480
    %557 = vmatprep.subr.bf16.mxu0 0
    %558 = vmatpush1.bf16.msra.mxu0 %v481
    %559 = vmatprep.subr.bf16.mxu0 0
    %560 = vmatpush1.bf16.msra.mxu0 %v482
    %561 = vmatprep.subr.bf16.mxu0 0
    %562 = vmatpush1.bf16.msra.mxu0 %v483
    %563 = vmatprep.subr.bf16.mxu0 0
    %564 = vmatpush1.bf16.msra.mxu0 %v484
    %565 = vmatprep.mubr.bf16.mxu0 %v278
    %566 = vmatmul.mubr.bf16.gmra.mrb[0].mxu0 %v277
    %v567 = vpop.f32.mrb[0].mxu0
    %v568 = vadd.f32 0.0, %v567
    %v569 = vpop.f32.mrb[0].mxu0
    %v570 = vpop.f32.mrb[0].mxu0
    %v571 = vadd.f32 0.0, %v570
    %v572 = vpop.f32.mrb[0].mxu0
    %573 = vmatprep.mubr.bf16.mxu0 %v282
    %574 = vmatmul.mubr.bf16.gmra.mrb[0].mxu0 %v281
    %v575 = vpop.f32.mrb[0].mxu0
    %v576 = vadd.f32 0.0, %v575
    %v577 = vpop.f32.mrb[0].mxu0
    %v578 = vpop.f32.mrb[0].mxu0
    %v579 = vadd.f32 0.0, %v578
    %v580 = vpop.f32.mrb[0].mxu0
    %581 = vmatprep.mubr.bf16.mxu0 %v286
    %582 = vmatmul.mubr.bf16.gmra.mrb[0].mxu0 %v285
    %v583 = vpop.f32.mrb[0].mxu0
    %v584 = vadd.f32 0.0, %v583
    %v585 = vpop.f32.mrb[0].mxu0
    %v586 = vpop.f32.mrb[0].mxu0
    %v587 = vadd.f32 0.0, %v586
    %v588 = vpop.f32.mrb[0].mxu0
    %589 = vmatprep.mubr.bf16.mxu0 %v290
    %590 = vmatmul.mubr.bf16.gmra.mrb[0].mxu0 %v289
    %v591 = vpop.f32.mrb[0].mxu0
    %v592 = vadd.f32 0.0, %v591
    %v593 = vpop.f32.mrb[0].mxu0
    %v594 = vpop.f32.mrb[0].mxu0
    %v595 = vadd.f32 0.0, %v594
    %v596 = vpop.f32.mrb[0].mxu0
    %597 = vmatprep.mubr.bf16.mxu0 %v294
    %598 = vmatmul.mubr.bf16.gmra.mrb[0].mxu0 %v293
    %v599 = vpop.f32.mrb[0].mxu0
    %v600 = vadd.f32 0.0, %v599
    %v601 = vpop.f32.mrb[0].mxu0
    %v602 = vpop.f32.mrb[0].mxu0
    %v603 = vadd.f32 0.0, %v602
    %v604 = vpop.f32.mrb[0].mxu0
    %605 = vmatprep.mubr.bf16.mxu0 %v298
    %606 = vmatmul.mubr.bf16.gmra.mrb[0].mxu0 %v297
    %v607 = vpop.f32.mrb[0].mxu0
    %v608 = vadd.f32 0.0, %v607
    %v609 = vpop.f32.mrb[0].mxu0
    %v610 = vpop.f32.mrb[0].mxu0
    %v611 = vadd.f32 0.0, %v610
    %v612 = vpop.f32.mrb[0].mxu0
    %613 = vmatprep.mubr.bf16.mxu0 %v302
    %614 = vmatmul.mubr.bf16.gmra.mrb[0].mxu0 %v301
    %v615 = vpop.f32.mrb[0].mxu0
    %v616 = vadd.f32 0.0, %v615
    %v617 = vpop.f32.mrb[0].mxu0
    %v618 = vpop.f32.mrb[0].mxu0
    %v619 = vadd.f32 0.0, %v618
    %v620 = vpop.f32.mrb[0].mxu0
    %621 = vmatprep.mubr.bf16.mxu0 %v306
    %622 = vmatmul.mubr.bf16.gmra.mrb[0].mxu0 %v305
    %v623 = vpop.f32.mrb[0].mxu0
    %v624 = vadd.f32 0.0, %v623
    %v625 = vpop.f32.mrb[0].mxu0
    %v626 = vpop.f32.mrb[0].mxu0
    %v627 = vadd.f32 0.0, %v626
    %v628 = vpop.f32.mrb[0].mxu0
    %629 = vdwg.mxu0
    %630 = vmatprep.subr.bf16.mxu0 0
    %631 = vmatpush1.bf16.msra.mxu0 %v485
    %632 = vmatprep.subr.bf16.mxu0 0
    %633 = vmatpush1.bf16.msra.mxu0 %v486
    %634 = vmatprep.subr.bf16.mxu0 0
    %635 = vmatpush1.bf16.msra.mxu0 %v487
    %636 = vmatprep.subr.bf16.mxu0 0
    %637 = vmatpush1.bf16.msra.mxu0 %v488
    %638 = vmatprep.subr.bf16.mxu0 0
    %639 = vmatpush1.bf16.msra.mxu0 %v489
    %640 = vmatprep.subr.bf16.mxu0 0
    %641 = vmatpush1.bf16.msra.mxu0 %v490
    %642 = vmatprep.subr.bf16.mxu0 0
    %643 = vmatpush1.bf16.msra.mxu0 %v491
    %644 = vmatprep.subr.bf16.mxu0 0
    %645 = vmatpush1.bf16.msra.mxu0 %v492
    %646 = vmatprep.subr.bf16.mxu0 0
    %647 = vmatpush1.bf16.msra.mxu0 %v493
    %648 = vmatprep.subr.bf16.mxu0 0
    %649 = vmatpush1.bf16.msra.mxu0 %v494
    %650 = vmatprep.subr.bf16.mxu0 0
    %651 = vmatpush1.bf16.msra.mxu0 %v495
    %652 = vmatprep.subr.bf16.mxu0 0
    %653 = vmatpush1.bf16.msra.mxu0 %v496
    %654 = vmatprep.subr.bf16.mxu0 0
    %655 = vmatpush1.bf16.msra.mxu0 %v497
    %656 = vmatprep.subr.bf16.mxu0 0
    %657 = vmatpush1.bf16.msra.mxu0 %v498
    %658 = vmatprep.subr.bf16.mxu0 0
    %659 = vmatpush1.bf16.msra.mxu0 %v499
    %660 = vmatprep.subr.bf16.mxu0 0
    %661 = vmatpush1.bf16.msra.mxu0 %v500
    %662 = vmatprep.mubr.bf16.mxu0 %v280
    %663 = vmatmul.mubr.bf16.gmra.mrb[0].mxu0 %v279
    %v664 = vpop.f32.mrb[0].mxu0
    %v665 = vadd.f32 %v568, %v664
    %v666 = vpop.f32.mrb[0].mxu0
    %v667 = vpop.f32.mrb[0].mxu0
    %v668 = vadd.f32 %v571, %v667
    %v669 = vpop.f32.mrb[0].mxu0
    %670 = vmatprep.mubr.bf16.mxu0 %v284
    %671 = vmatmul.mubr.bf16.gmra.mrb[0].mxu0 %v283
    %v672 = vpop.f32.mrb[0].mxu0
    %v673 = vadd.f32 %v576, %v672
    %v674 = vpop.f32.mrb[0].mxu0
    %v675 = vpop.f32.mrb[0].mxu0
    %v676 = vadd.f32 %v579, %v675
    %v677 = vpop.f32.mrb[0].mxu0
    %678 = vmatprep.mubr.bf16.mxu0 %v288
    %679 = vmatmul.mubr.bf16.gmra.mrb[0].mxu0 %v287
    %v680 = vpop.f32.mrb[0].mxu0
    %v681 = vadd.f32 %v584, %v680
    %v682 = vpop.f32.mrb[0].mxu0
    %v683 = vpop.f32.mrb[0].mxu0
    %v684 = vadd.f32 %v587, %v683
    %v685 = vpop.f32.mrb[0].mxu0
    %686 = vmatprep.mubr.bf16.mxu0 %v292
    %687 = vmatmul.mubr.bf16.gmra.mrb[0].mxu0 %v291
    %v688 = vpop.f32.mrb[0].mxu0
    %v689 = vadd.f32 %v592, %v688
    %v690 = vpop.f32.mrb[0].mxu0
    %v691 = vpop.f32.mrb[0].mxu0
    %v692 = vadd.f32 %v595, %v691
    %v693 = vpop.f32.mrb[0].mxu0
    %694 = vmatprep.mubr.bf16.mxu0 %v296
    %695 = vmatmul.mubr.bf16.gmra.mrb[0].mxu0 %v295
    %v696 = vpop.f32.mrb[0].mxu0
    %v697 = vadd.f32 %v600, %v696
    %v698 = vpop.f32.mrb[0].mxu0
    %v699 = vpop.f32.mrb[0].mxu0
    %v700 = vadd.f32 %v603, %v699
    %v701 = vpop.f32.mrb[0].mxu0
    %702 = vmatprep.mubr.bf16.mxu0 %v300
    %703 = vmatmul.mubr.bf16.gmra.mrb[0].mxu0 %v299
    %v704 = vpop.f32.mrb[0].mxu0
    %v705 = vadd.f32 %v608, %v704
    %v706 = vpop.f32.mrb[0].mxu0
    %v707 = vpop.f32.mrb[0].mxu0
    %v708 = vadd.f32 %v611, %v707
    %v709 = vpop.f32.mrb[0].mxu0
    %710 = vmatprep.mubr.bf16.mxu0 %v304
    %711 = vmatmul.mubr.bf16.gmra.mrb[0].mxu0 %v303
    %v712 = vpop.f32.mrb[0].mxu0
    %v713 = vadd.f32 %v616, %v712
    %v714 = vpop.f32.mrb[0].mxu0
    %v715 = vpop.f32.mrb[0].mxu0
    %v716 = vadd.f32 %v619, %v715
    %v717 = vpop.f32.mrb[0].mxu0
    %718 = vmatprep.mubr.bf16.mxu0 %v308
    %719 = vmatmul.mubr.bf16.gmra.mrb[0].mxu0 %v307
    %v720 = vpop.f32.mrb[0].mxu0
    %v721 = vadd.f32 %v624, %v720
    %v722 = vpop.f32.mrb[0].mxu0
    %v723 = vpop.f32.mrb[0].mxu0
    %v724 = vadd.f32 %v627, %v723
    %v725 = vpop.f32.mrb[0].mxu0
    %726 = vdwg.mxu0
    %v727 = vadd.f32 %v133, %v665
    %v728 = vadd.f32 %v134, %v668
    %v729 = vadd.f32 %v135, %v673
    %v730 = vadd.f32 %v136, %v676
    %v731 = vadd.f32 %v137, %v681
    %v732 = vadd.f32 %v138, %v684
    %v733 = vadd.f32 %v139, %v689
    %v734 = vadd.f32 %v140, %v692
    %v735 = vadd.f32 %v141, %v697
    %v736 = vadd.f32 %v142, %v700
    %v737 = vadd.f32 %v143, %v705
    %v738 = vadd.f32 %v144, %v708
    %v739 = vadd.f32 %v145, %v713
    %v740 = vadd.f32 %v146, %v716
    %v741 = vadd.f32 %v147, %v721
    %v742 = vadd.f32 %v148, %v724
    %743 = vst [vmem:[#allocation2] sm:$0xff] %v727
    %744 = vst [vmem:[#allocation2 + $0x8] sm:$0xff] %v728
    %745 = vst [vmem:[#allocation2 + $0x10] sm:$0xff] %v729
    %746 = vst [vmem:[#allocation2 + $0x18] sm:$0xff] %v730
    %747 = vst [vmem:[#allocation2 + $0x20] sm:$0xff] %v731
    %748 = vst [vmem:[#allocation2 + $0x28] sm:$0xff] %v732
    %749 = vst [vmem:[#allocation2 + $0x30] sm:$0xff] %v733
    %750 = vst [vmem:[#allocation2 + $0x38] sm:$0xff] %v734
    %751 = vst [vmem:[#allocation2 + $0x40] sm:$0xff] %v735
    %752 = vst [vmem:[#allocation2 + $0x48] sm:$0xff] %v736
    %753 = vst [vmem:[#allocation2 + $0x50] sm:$0xff] %v737
    %754 = vst [vmem:[#allocation2 + $0x58] sm:$0xff] %v738
    %755 = vst [vmem:[#allocation2 + $0x60] sm:$0xff] %v739
    %756 = vst [vmem:[#allocation2 + $0x68] sm:$0xff] %v740
    %757 = vst [vmem:[#allocation2 + $0x70] sm:$0xff] %v741
    %758 = vst [vmem:[#allocation2 + $0x78] sm:$0xff] %v742
    // Predicated region
    $region26: #{tpu_custom_call.1} parent=1 // pred_check
      %p759 = pneg %p44
    $region27: #{tpu_custom_call.1} parent=1 // pred_check_branch
      %761 = sbr.rel (%p759) target = $region29
    $region28: #{tpu_custom_call.1} parent=1 // pred_region
      %v762 = vld [vmem:[#allocation2] sm:$0xff]
      %v763 = vld [vmem:[#allocation2 + $0x8] sm:$0xff]
      %v764 = vld [vmem:[#allocation2 + $0x10] sm:$0xff]
      %v765 = vld [vmem:[#allocation2 + $0x18] sm:$0xff]
      %v766 = vld [vmem:[#allocation2 + $0x20] sm:$0xff]
      %v767 = vld [vmem:[#allocation2 + $0x28] sm:$0xff]
      %v768 = vld [vmem:[#allocation2 + $0x30] sm:$0xff]
      %v769 = vld [vmem:[#allocation2 + $0x38] sm:$0xff]
      %v770 = vld [vmem:[#allocation2 + $0x40] sm:$0xff]
      %v771 = vld [vmem:[#allocation2 + $0x48] sm:$0xff]
      %v772 = vld [vmem:[#allocation2 + $0x50] sm:$0xff]
      %v773 = vld [vmem:[#allocation2 + $0x58] sm:$0xff]
      %v774 = vld [vmem:[#allocation2 + $0x60] sm:$0xff]
      %v775 = vld [vmem:[#allocation2 + $0x68] sm:$0xff]
      %v776 = vld [vmem:[#allocation2 + $0x70] sm:$0xff]
      %v777 = vld [vmem:[#allocation2 + $0x78] sm:$0xff]
      %v778 = vld [vmem:[%s2] sm:$0x1]
      %v780 = vlaneseq
      %v781 = vshrl.u32 %v780, 7
      %v782 = vsub.s32 0, %v781
      %v783 = vrot.slane %v778, %v782
      %v785 = vadd.f32 %v762, %v783
      %v786 = vadd.f32 %v763, %v783
      %v787 = vadd.f32 %v764, %v783
      %v788 = vadd.f32 %v765, %v783
      %v789 = vadd.f32 %v766, %v783
      %v790 = vadd.f32 %v767, %v783
      %v791 = vadd.f32 %v768, %v783
      %v792 = vadd.f32 %v769, %v783
      %v793 = vadd.f32 %v770, %v783
      %v794 = vadd.f32 %v771, %v783
      %v795 = vadd.f32 %v772, %v783
      %v796 = vadd.f32 %v773, %v783
      %v797 = vadd.f32 %v774, %v783
      %v798 = vadd.f32 %v775, %v783
      %v799 = vadd.f32 %v776, %v783
      %v800 = vadd.f32 %v777, %v783
      %801 = vst [vmem:[#allocation8] sm:$0xff] %v785
      %802 = vst [vmem:[#allocation8 + $0x8] sm:$0xff] %v786
      %803 = vst [vmem:[#allocation8 + $0x10] sm:$0xff] %v787
      %804 = vst [vmem:[#allocation8 + $0x18] sm:$0xff] %v788
      %805 = vst [vmem:[#allocation8 + $0x20] sm:$0xff] %v789
      %806 = vst [vmem:[#allocation8 + $0x28] sm:$0xff] %v790
      %807 = vst [vmem:[#allocation8 + $0x30] sm:$0xff] %v791
      %808 = vst [vmem:[#allocation8 + $0x38] sm:$0xff] %v792
      %809 = vst [vmem:[#allocation8 + $0x40] sm:$0xff] %v793
      %810 = vst [vmem:[#allocation8 + $0x48] sm:$0xff] %v794
      %811 = vst [vmem:[#allocation8 + $0x50] sm:$0xff] %v795
      %812 = vst [vmem:[#allocation8 + $0x58] sm:$0xff] %v796
      %813 = vst [vmem:[#allocation8 + $0x60] sm:$0xff] %v797
      %814 = vst [vmem:[#allocation8 + $0x68] sm:$0xff] %v798
      %815 = vst [vmem:[#allocation8 + $0x70] sm:$0xff] %v799
      %816 = vst [vmem:[#allocation8 + $0x78] sm:$0xff] %v800
    $region29: #{tpu_custom_call.1} parent=1 // pred_fallthru
      _
    // Predicated region
    $region30: #{tpu_custom_call.1} parent=1 // pred_check
      _
    $region31: #{tpu_custom_call.1} parent=1 // pred_check_branch
      %818 = sbr.rel (0) target = $region33
    $region32: #{tpu_custom_call.1} parent=1 // pred_region
      %s820 = ssub.s32 2048, 2048
      %821 = vsyncadd [#allocation5], %s820
      %s822 = sshll.u32 [#allocation8], 4
      %s823 = int_to_ptr.vmem [resolvable:$true] %s822
      %828 = dma.vmem_to_hbm [thread:$0]  %s823, 2048, %s3, [#allocation5], 128, 128, 8
    $region33: #{tpu_custom_call.1} parent=1 // pred_fallthru
      _
    // Predicated region
    $region34: #{tpu_custom_call.1} parent=1 // pred_check
      _
    $region35: #{tpu_custom_call.1} parent=1 // pred_check_branch
      %830 = sbr.rel (0) target = $region37
    $region36: #{tpu_custom_call.1} parent=1 // pred_region
      %831 = dma.done [#allocation5], 2048
    $region37: #{tpu_custom_call.1} parent=1 // pred_fallthru
      _
    %832 = vsyncpa [#allocation4], 1
    %833 = vsyncpa [#allocation7], 1
    %834 = vsyncpa [#allocation5], 1

</llo_original>
